<compile_context>
chip_gen: v6e
topology: v6e:2x2x1
jax: 0.10.0
libtpu: 0.0.40
codegen_flags: <defaults>
</compile_context>

<pallas_src>
import jax
import jax.numpy as jnp
from jax.experimental import pallas as pl
from jax.experimental.pallas import tpu as pltpu


def _round_up(n, m):
    return ((n + m - 1) // m) * m


def _vmem_capacity_bytes():
    """Physical VMEM per TensorCore (64 MiB v7x, 128 MiB v5e/v6e)."""
    try:
        cap = getattr(pltpu.get_tpu_info(), "vmem_capacity_bytes", None)
        if cap:
            return int(cap)
    except Exception:
        pass
    return 64 << 20  # conservative fallback (v7x-sized)


def _make_fused_kernel(sources, layer_pads, batch_tile, out_index):
    """Build the fused forward kernel for a fixed genome structure.

    Kernel refs: (x_ref, w_0, ..., w_{S-1}, bias_ref, o_ref).  w_k is the
    per-source packed weight [in_pad, totN_pad]; bias_ref holds every source's
    bias segment concatenated along lanes (segments start on 128-lane
    boundaries, so in-kernel bias slicing is lane-aligned).
    """
    num_w = len(sources)
    by_src = {s["src"]: s for s in sources}

    def kernel(*refs):
        x_ref = refs[0]
        w_refs = refs[1:1 + num_w]
        b_ref = refs[1 + num_w]
        o_ref = refs[-1]

        # Contributions pending per destination layer; summed lazily when the
        # destination becomes a source (or is emitted), so each accumulator is
        # materialized exactly once.
        pending = {d: [] for d in range(1, out_index + 1)}
        act = None
        for s in range(out_index + 1):
            if s == 0:
                act = x_ref[...].astype(jnp.float32)
            else:
                contribs = pending[s]
                if contribs:
                    act = contribs[0]
                    for c in contribs[1:]:
                        act = act + c
                else:  # destination with no incoming edges stays zero
                    act = jnp.zeros((batch_tile, layer_pads[s]), jnp.float32)

            info = by_src.get(s)
            if info is not None:
                w = w_refs[info["widx"]][...]
                lhs = act if act.dtype == w.dtype else act.astype(w.dtype)
                # One MXU pass covers every live outgoing edge of this source.
                y = jnp.dot(lhs, w, preferred_element_type=jnp.float32)
                off, tot = info["bias_off"], info["totn_pad"]
                b = b_ref[:, off:off + tot]              # 128-aligned slice
                z = jnp.maximum(y + b, jnp.float32(0.0))
                edges = info["edges"]
                if len(edges) == 1 and tot == layer_pads[edges[0][0]]:
                    # Single edge: packed lanes beyond the valid width are
                    # exactly zero (zero weight cols + zero bias -> relu(0)).
                    pending[edges[0][0]].append(z)
                else:
                    for dst, col, width in edges:
                        seg = z[:, col:col + width]
                        dst_pad = layer_pads[dst]
                        if width < dst_pad:
                            seg = jnp.concatenate(
                                [seg, jnp.zeros((batch_tile, dst_pad - width),
                                                jnp.float32)], axis=1)
                        pending[dst].append(seg)

        o_ref[...] = act.astype(o_ref.dtype)

    return kernel


class NeuralNetworkPallas:
    """JAX/Pallas port of the PyTorch NeuralNetwork (genome) module.

    `layers` mirrors the PyTorch constructor: a list of fromLayers, each a
    list of (weights [out, in], biases [out]) connecting layer i -> i + i2 + 1.
    `allToAll` is unused by the original forward pass.
    """

    def __init__(self, layers, allToAll=None, use_bf16=False):
        del allToAll  # unused by the original forward
        self.use_bf16 = bool(use_bf16)
        w_dtype = jnp.bfloat16 if self.use_bf16 else jnp.float32

        # mirrors the PyTorch __init__: one output slot per non-empty fromLayer
        # (stops at the first empty one — same structural behavior as original)
        self.out_sizes = []
        for fromLayer in layers:
            if len(fromLayer) == 0:
                break
            self.out_sizes.append(int(jnp.asarray(fromLayer[0][1]).shape[0]))

        self.out_index = len(layers) - 1
        if self.out_index > len(self.out_sizes):
            # the original module would IndexError here; fail loudly instead
            raise ValueError("return index is past the outputs list")

        self.dst_pads = [_round_up(max(s, 1), 128) for s in self.out_sizes]

        # --- per-source packing: concatenate live outgoing edges along N
        #     before padding; drop edges whose destination is never observable.
        self.sources = []      # static structure used by the kernel builder
        self.w_packed = []     # one [in_pad, totN_pad] weight per source
        bias_cols = []
        self.in_pad0 = None
        bias_off = 0
        for s, fromLayer in enumerate(layers):
            live, col = [], 0
            for i2, (W, b) in enumerate(fromLayer):
                dst = s + i2 + 1
                if dst > self.out_index:
                    continue  # dead edge: cannot affect the returned layer
                W = jnp.asarray(W, jnp.float32)
                b = jnp.asarray(b, jnp.float32)
                live.append((dst, col, int(W.shape[0]), W, b))
                col += int(W.shape[0])
            if not live:
                continue
            din_p = _round_up(max(int(W.shape[1]) for _, _, _, W, _ in live), 128)
            if s == 0:
                self.in_pad0 = din_p
            tot_p = _round_up(col, 128)
            Wp = jnp.zeros((din_p, tot_p), jnp.float32)
            bp = jnp.zeros((1, tot_p), jnp.float32)
            for dst, c0, w, W, b in live:
                Wp = Wp.at[:W.shape[1], c0:c0 + w].set(W.T)
                bp = bp.at[0, c0:c0 + w].set(b)
            self.w_packed.append(Wp.astype(w_dtype))
            bias_cols.append(bp)
            self.sources.append(dict(
                src=s, widx=len(self.w_packed) - 1, bias_off=bias_off,
                totn_pad=tot_p,
                edges=tuple((dst, c0, w) for dst, c0, w, _, _ in live)))
            bias_off += tot_p

        if bias_cols:
            self.b_packed = jnp.concatenate(bias_cols, axis=1)
        else:
            self.b_packed = jnp.zeros((1, 128), jnp.float32)  # dummy, never read

        self._vmem_capacity = _vmem_capacity_bytes()
        self._jit_forward = jax.jit(self._forward_impl)

    # ------------------------------------------------------------------ #

    def _estimate_vmem(self, batch_tile, din_pad0):
        layer_pads = [din_pad0] + list(self.dst_pads)
        out_pad = layer_pads[self.out_index]
        wbytes = sum(int(w.size) * int(w.dtype.itemsize) for w in self.w_packed)
        bbytes = 8 * int(self.b_packed.shape[1]) * 4        # 8-sublane padding
        io = 2 * batch_tile * 4 * (din_pad0 + out_pad)       # pipelined x / out
        acts = sum(batch_tile * p * 4 for p in layer_pads[: self.out_index + 1])
        ymax = max([batch_tile * s["totn_pad"] * 4 for s in self.sources],
                   default=0)
        est = wbytes + bbytes + io + acts + 2 * ymax
        return int(est * 1.3) + (2 << 20)  # spill / Mosaic scratch headroom

    def _pick_batch_tile(self, batch, din_pad0):
        bp8 = _round_up(batch, 8)
        if bp8 <= 8:
            prefs = (8,)
        elif bp8 <= 256:
            # >= 2 batch tiles so both TensorCores get work on v7x
            # (neutral on single-TC v5e/v6e); fall back if VMEM-tight.
            half = _round_up((bp8 + 1) // 2, 8)
            prefs = (half,) + tuple(c for c in (128, 64, 32, 16, 8) if c < half)
        elif bp8 <= 1024:
            prefs = (256, 128, 64, 32, 16, 8)
        else:
            # large tiles amortize per-grid-step overhead on 128 MiB-VMEM
            # parts (v5e/v6e); the VMEM check drops v7x back to <= 128/64.
            prefs = (512, 256, 128, 64, 32, 16, 8)
        cap = int(self._vmem_capacity * 0.85)
        for t in prefs:
            if self._estimate_vmem(t, din_pad0) <= cap:
                return t
        return prefs[-1]

    def _forward_impl(self, x, w_packed, b_packed):
        batch, din = x.shape
        din_pad0 = _round_up(din, 128)
        if self.in_pad0 is not None and din_pad0 != self.in_pad0:
            raise ValueError("input feature dim does not match genome weights")

        batch_tile = self._pick_batch_tile(batch, din_pad0)
        batch_pad = _round_up(batch, batch_tile)

        layer_pads = [din_pad0] + list(self.dst_pads)
        out_pad = layer_pads[self.out_index]
        out_valid = din if self.out_index == 0 else self.out_sizes[self.out_index - 1]

        x_p = jnp.zeros((batch_pad, din_pad0), jnp.float32).at[:batch, :din].set(x)

        kernel = _make_fused_kernel(self.sources, layer_pads, batch_tile,
                                    self.out_index)

        # Grid-invariant weights / bias: whole-array VMEM residency, single
        # copy (no double-buffering over the batch grid).
        resident = pl.BlockSpec(memory_space=pltpu.MemorySpace.VMEM)
        in_specs = [pl.BlockSpec((batch_tile, din_pad0), lambda bi: (bi, 0))]
        in_specs += [resident] * len(w_packed)
        in_specs += [resident]  # packed bias

        # Generation-aware VMEM limit: always set (v5e default is only 16 MiB),
        # capped with headroom under the physical per-core capacity.
        est = self._estimate_vmem(batch_tile, din_pad0)
        cap = int(self._vmem_capacity * 0.85)
        # TODO(synk): genomes whose resident packed weights exceed `cap` need
        # per-layer weight streaming (pltpu.emit_pipeline) instead of full
        # residency; not implemented here.
        vmem_limit = int(max(16 << 20, min(est, cap)))

        out = pl.pallas_call(
            kernel,
            out_shape=jax.ShapeDtypeStruct((batch_pad, out_pad), jnp.float32),
            grid_spec=pltpu.PrefetchScalarGridSpec(
                num_scalar_prefetch=0,
                grid=(batch_pad // batch_tile,),
                in_specs=in_specs,
                out_specs=pl.BlockSpec((batch_tile, out_pad), lambda bi: (bi, 0)),
            ),
            compiler_params=pltpu.CompilerParams(
                dimension_semantics=("parallel",),
                vmem_limit_bytes=vmem_limit,
            ),
        )(x_p, *w_packed, b_packed)

        return out[:batch, :out_valid]

    def forward(self, x):
        x = jnp.asarray(x, jnp.float32)
        return self._jit_forward(x, tuple(self.w_packed), self.b_packed)


def _reference_forward(layers, x):
    """Pure-JAX reference of the same semantics (for verification)."""
    x = jnp.asarray(x, jnp.float32)
    fromToLayers = [[(jnp.asarray(W, jnp.float32), jnp.asarray(b, jnp.float32))
                     for W, b in fl] for fl in layers]
    out_sizes = []
    for fl in fromToLayers:
        if len(fl) == 0:
            break
        out_sizes.append(int(fl[0][1].shape[0]))
    outputs = [x] + [jnp.zeros((x.shape[0], s), jnp.float32) for s in out_sizes]
    for i, fl in enumerate(fromToLayers):
        for i2, (W, b) in enumerate(fl):
            outputs[i + i2 + 1] = outputs[i + i2 + 1] + jax.nn.relu(outputs[i] @ W.T + b)
    return outputs[len(fromToLayers) - 1]


if __name__ == "__main__":
    key = jax.random.PRNGKey(0)

    # Small all-to-all-forward genome: every layer connects to all later layers;
    # the last layer has no outgoing connections (empty fromLayer).
    sizes = [16, 32, 32, 8]
    layers = []
    for i in range(len(sizes)):
        fromLayer = []
        for j in range(i + 1, len(sizes)):
            key, kw, kb = jax.random.split(key, 3)
            W = 0.1 * jax.random.normal(kw, (sizes[j], sizes[i]), jnp.float32)
            b = 0.1 * jax.random.normal(kb, (sizes[j],), jnp.float32)
            fromLayer.append((W, b))
        layers.append(fromLayer)

    key, kx = jax.random.split(key)
    x = jax.random.normal(kx, (2, sizes[0]), jnp.float32)
    ref = _reference_forward(layers, x)

    # f32 path — matches the f32 PyTorch reference tightly.
    net = NeuralNetworkPallas(layers, allToAll=True)
    out = jax.block_until_ready(net.forward(x))
    assert out.shape == (2, sizes[-1]), out.shape
    assert jnp.allclose(out, ref, atol=1e-5, rtol=1e-5)

    # bf16-weight path (MXU-native, f32 accumulation) — looser tolerance.
    net_bf16 = NeuralNetworkPallas(layers, allToAll=True, use_bf16=True)
    out16 = jax.block_until_ready(net_bf16.forward(x))
    assert out16.shape == (2, sizes[-1]), out16.shape
    assert jnp.allclose(out16, ref, atol=1e-1, rtol=1e-1)

    print("KERNEL_OK")
</pallas_src>

<mosaic_0001>
module attributes {stable_mosaic.version = 11 : i64} {
  func.func @kernel(%arg0: i32, %arg1: memref<8x128xf32, #tpu.memory_space<vmem>>, %arg2: memref<128x128xf32, #tpu.memory_space<vmem>>, %arg3: memref<128x128xf32, #tpu.memory_space<vmem>>, %arg4: memref<128x128xf32, #tpu.memory_space<vmem>>, %arg5: memref<1x384xf32, #tpu.memory_space<vmem>>, %arg6: memref<8x128xf32, #tpu.memory_space<vmem>>) attributes {dimension_semantics = [#tpu.dimension_semantics<parallel>], iteration_bounds = array<i64: 1>, scalar_prefetch = 0 : i64, scratch_operands = 0 : i64, tpu.core_type = #tpu.core_type<tc>, window_params = [{transform_indices = @transform_0, window_bounds = array<i64: 8, 128>}, {pipeline_mode = #tpu.pipeline_mode<synchronous>, transform_indices = @transform_1, window_bounds = array<i64: 128, 128>}, {pipeline_mode = #tpu.pipeline_mode<synchronous>, transform_indices = @transform_2, window_bounds = array<i64: 128, 128>}, {pipeline_mode = #tpu.pipeline_mode<synchronous>, transform_indices = @transform_3, window_bounds = array<i64: 128, 128>}, {pipeline_mode = #tpu.pipeline_mode<synchronous>, transform_indices = @transform_4, window_bounds = array<i64: 1, 384>}, {transform_indices = @transform_5, window_bounds = array<i64: 8, 128>}]} {
    %c0 = arith.constant 0 : index
    %c0_0 = arith.constant 0 : index
    %0 = vector.load %arg1[%c0, %c0_0] : memref<8x128xf32, #tpu.memory_space<vmem>>, vector<8x128xf32>
    %c0_1 = arith.constant 0 : index
    %c0_2 = arith.constant 0 : index
    %1 = vector.load %arg2[%c0_1, %c0_2] : memref<128x128xf32, #tpu.memory_space<vmem>>, vector<128x128xf32>
    %cst = arith.constant dense<0.000000e+00> : vector<8x128xf32>
    %2 = tpu.matmul %0, %1, %cst {dimension_numbers = #tpu.dot_dimension_numbers<[1], [0], [0], [1], [0, 0, 1, 1], [], []>} : vector<8x128xf32>, vector<128x128xf32>, vector<8x128xf32> -> vector<8x128xf32>
    %c0_3 = arith.constant 0 : index
    %c0_4 = arith.constant 0 : index
    %3 = vector.load %arg5[%c0_3, %c0_4] : memref<1x384xf32, #tpu.memory_space<vmem>>, vector<1x128xf32>
    %4 = vector.broadcast %3 : vector<1x128xf32> to vector<8x128xf32>
    %5 = arith.addf %2, %4 : vector<8x128xf32>
    %cst_5 = arith.constant 0.000000e+00 : f32
    %6 = vector.broadcast %cst_5 : f32 to vector<8x128xf32>
    %7 = arith.maximumf %5, %6 : vector<8x128xf32>
    %8 = vector.extract_strided_slice %7 {offsets = [0, 0], sizes = [8, 32], strides = [1, 1]} : vector<8x128xf32> to vector<8x32xf32>
    %cst_6 = arith.constant 0.000000e+00 : f32
    %9 = vector.broadcast %cst_6 : f32 to vector<8x96xf32>
    %10 = tpu.concatenate %8, %9 in 1 : vector<8x32xf32>, vector<8x96xf32> -> vector<8x128xf32>
    %11 = vector.extract_strided_slice %7 {offsets = [0, 32], sizes = [8, 32], strides = [1, 1]} : vector<8x128xf32> to vector<8x32xf32>
    %cst_7 = arith.constant 0.000000e+00 : f32
    %12 = vector.broadcast %cst_7 : f32 to vector<8x96xf32>
    %13 = tpu.concatenate %11, %12 in 1 : vector<8x32xf32>, vector<8x96xf32> -> vector<8x128xf32>
    %14 = vector.extract_strided_slice %7 {offsets = [0, 64], sizes = [8, 8], strides = [1, 1]} : vector<8x128xf32> to vector<8x8xf32>
    %cst_8 = arith.constant 0.000000e+00 : f32
    %15 = vector.broadcast %cst_8 : f32 to vector<8x120xf32>
    %16 = tpu.concatenate %14, %15 in 1 : vector<8x8xf32>, vector<8x120xf32> -> vector<8x128xf32>
    %c0_9 = arith.constant 0 : index
    %c0_10 = arith.constant 0 : index
    %17 = vector.load %arg3[%c0_9, %c0_10] : memref<128x128xf32, #tpu.memory_space<vmem>>, vector<128x128xf32>
    %cst_11 = arith.constant dense<0.000000e+00> : vector<8x128xf32>
    %18 = tpu.matmul %10, %17, %cst_11 {dimension_numbers = #tpu.dot_dimension_numbers<[1], [0], [0], [1], [0, 0, 1, 1], [], []>} : vector<8x128xf32>, vector<128x128xf32>, vector<8x128xf32> -> vector<8x128xf32>
    %c0_12 = arith.constant 0 : index
    %c128 = arith.constant 128 : index
    %19 = vector.load %arg5[%c0_12, %c128] : memref<1x384xf32, #tpu.memory_space<vmem>>, vector<1x128xf32>
    %20 = vector.broadcast %19 : vector<1x128xf32> to vector<8x128xf32>
    %21 = arith.addf %18, %20 : vector<8x128xf32>
    %cst_13 = arith.constant 0.000000e+00 : f32
    %22 = vector.broadcast %cst_13 : f32 to vector<8x128xf32>
    %23 = arith.maximumf %21, %22 : vector<8x128xf32>
    %24 = vector.extract_strided_slice %23 {offsets = [0, 0], sizes = [8, 32], strides = [1, 1]} : vector<8x128xf32> to vector<8x32xf32>
    %cst_14 = arith.constant 0.000000e+00 : f32
    %25 = vector.broadcast %cst_14 : f32 to vector<8x96xf32>
    %26 = tpu.concatenate %24, %25 in 1 : vector<8x32xf32>, vector<8x96xf32> -> vector<8x128xf32>
    %27 = vector.extract_strided_slice %23 {offsets = [0, 32], sizes = [8, 8], strides = [1, 1]} : vector<8x128xf32> to vector<8x8xf32>
    %cst_15 = arith.constant 0.000000e+00 : f32
    %28 = vector.broadcast %cst_15 : f32 to vector<8x120xf32>
    %29 = tpu.concatenate %27, %28 in 1 : vector<8x8xf32>, vector<8x120xf32> -> vector<8x128xf32>
    %30 = arith.addf %13, %26 : vector<8x128xf32>
    %c0_16 = arith.constant 0 : index
    %c0_17 = arith.constant 0 : index
    %31 = vector.load %arg4[%c0_16, %c0_17] : memref<128x128xf32, #tpu.memory_space<vmem>>, vector<128x128xf32>
    %cst_18 = arith.constant dense<0.000000e+00> : vector<8x128xf32>
    %32 = tpu.matmul %30, %31, %cst_18 {dimension_numbers = #tpu.dot_dimension_numbers<[1], [0], [0], [1], [0, 0, 1, 1], [], []>} : vector<8x128xf32>, vector<128x128xf32>, vector<8x128xf32> -> vector<8x128xf32>
    %c0_19 = arith.constant 0 : index
    %c256 = arith.constant 256 : index
    %33 = vector.load %arg5[%c0_19, %c256] : memref<1x384xf32, #tpu.memory_space<vmem>>, vector<1x128xf32>
    %34 = vector.broadcast %33 : vector<1x128xf32> to vector<8x128xf32>
    %35 = arith.addf %32, %34 : vector<8x128xf32>
    %cst_20 = arith.constant 0.000000e+00 : f32
    %36 = vector.broadcast %cst_20 : f32 to vector<8x128xf32>
    %37 = arith.maximumf %35, %36 : vector<8x128xf32>
    %38 = arith.addf %16, %29 : vector<8x128xf32>
    %39 = arith.addf %38, %37 : vector<8x128xf32>
    %c0_21 = arith.constant 0 : index
    %c0_22 = arith.constant 0 : index
    %40 = vector.load %arg6[%c0_21, %c0_22] : memref<8x128xf32, #tpu.memory_space<vmem>>, vector<8x128xf32>
    tpu.vector_store %arg6[%c0_21, %c0_22], %39 {strides = array<i32>} : memref<8x128xf32, #tpu.memory_space<vmem>>, vector<8x128xf32>,
    return
  }
  func.func @transform_0(%arg0: i32) -> (i32, i32) {
    %c0_i32 = arith.constant 0 : i32
    %c0_i32_0 = arith.constant 0 : i32
    return %arg0, %c0_i32 : i32, i32
  }
  func.func @transform_1(%arg0: i32) -> (i32, i32) {
    %c0_i32 = arith.constant 0 : i32
    %c0_i32_0 = arith.constant 0 : i32
    %c0_i32_1 = arith.constant 0 : i32
    return %c0_i32, %c0_i32_0 : i32, i32
  }
  func.func @transform_2(%arg0: i32) -> (i32, i32) {
    %c0_i32 = arith.constant 0 : i32
    %c0_i32_0 = arith.constant 0 : i32
    %c0_i32_1 = arith.constant 0 : i32
    return %c0_i32, %c0_i32_0 : i32, i32
  }
  func.func @transform_3(%arg0: i32) -> (i32, i32) {
    %c0_i32 = arith.constant 0 : i32
    %c0_i32_0 = arith.constant 0 : i32
    %c0_i32_1 = arith.constant 0 : i32
    return %c0_i32, %c0_i32_0 : i32, i32
  }
  func.func @transform_4(%arg0: i32) -> (i32, i32) {
    %c0_i32 = arith.constant 0 : i32
    %c0_i32_0 = arith.constant 0 : i32
    %c0_i32_1 = arith.constant 0 : i32
    return %c0_i32, %c0_i32_0 : i32, i32
  }
  func.func @transform_5(%arg0: i32) -> (i32, i32) {
    %c0_i32 = arith.constant 0 : i32
    %c0_i32_0 = arith.constant 0 : i32
    return %arg0, %c0_i32 : i32, i32
  }
}

</mosaic_0001>

<llo_original>
// kernel: _forward_impl.1
$region0: #{_forward_impl.1}
  #allocation0 [shape = 'u32[]', space=smem, size = 0x4, offset = 0x4, fixed_abs, tag = 'smem constant byte address 0x4 - core index']
  #allocation1 [shape = 'u32[144,128]{1,0:T(1,128)}', space=vmem, size = 0x12000, scoped, tag = 'internal scratch']
  %s0 = inlined_call_operand.vmem [shape: f32[8,128], index: 0, kind: input, shape index: {}]
  %s1 = inlined_call_operand.hbm [shape: f32[128,128], index: 1, kind: input, shape index: {}]
  %s2 = inlined_call_operand.hbm [shape: f32[128,128], index: 2, kind: input, shape index: {}]
  %s3 = inlined_call_operand.hbm [shape: f32[128,128], index: 3, kind: input, shape index: {}]
  %s4 = inlined_call_operand.vmem [shape: f32[1,384], index: 4, kind: input, shape index: {}]
  %s5 = inlined_call_operand.vmem [shape: f32[8,128], index: 5, kind: output, shape index: {}]
  %s6 = sld [smem:[#allocation0]]
  $region42: #{_forward_impl.1} parent=0
    _
  %s8 = ssub.s32 1, %s6
  %s9 = scalar_select 0, %s8, %s6
  $region1: #{_forward_impl.1} parent=0
    #allocation2 [shape = 'u8[65536]{0}', space=vmem, size = 0x10000, scoped, tag = 'input window, operand 1, single buffered']
    #allocation3 [shape = 's32[1]{0}', space=sflag, size = 0x4, scoped, tag = 'scoped memory for _forward_impl.1']
    #allocation4 [shape = 'u8[65536]{0}', space=vmem, size = 0x10000, scoped, tag = 'input window, operand 2, single buffered']
    #allocation5 [shape = 's32[1]{0}', space=sflag, size = 0x4, scoped, tag = 'scoped memory for _forward_impl.1']
    #allocation6 [shape = 'u8[65536]{0}', space=vmem, size = 0x10000, scoped, tag = 'input window, operand 3, single buffered']
    %10 = vsyncpa [#allocation3], 0
    %11 = vsyncpa [#allocation5], 0
    // Predicated region
    $region2: #{_forward_impl.1} parent=1 // pred_check
      _
    $region3: #{_forward_impl.1} parent=1 // pred_check_branch
      %13 = sbr.rel (0) target = $region5
    $region4: #{_forward_impl.1} parent=1 // pred_region
      _
    $region5: #{_forward_impl.1} parent=1 // pred_fallthru
      _
    // Predicated region
    $region6: #{_forward_impl.1} parent=1 // pred_check
      _
    $region7: #{_forward_impl.1} parent=1 // pred_check_branch
      %15 = sbr.rel (0) target = $region9
    $region8: #{_forward_impl.1} parent=1 // pred_region
      %s17 = ssub.s32 2048, 2048
      %18 = vsyncadd [#allocation3], %s17
      %s19 = sshll.u32 [#allocation2], 4
      %s20 = int_to_ptr.vmem [resolvable:$true] %s19
      %25 = dma.hbm_to_vmem [thread:$0]  %s1, 2048, %s20, [#allocation3], 128, 128, 8
    $region9: #{_forward_impl.1} parent=1 // pred_fallthru
      _
    // Predicated region
    $region10: #{_forward_impl.1} parent=1 // pred_check
      _
    $region11: #{_forward_impl.1} parent=1 // pred_check_branch
      %27 = sbr.rel (0) target = $region13
    $region12: #{_forward_impl.1} parent=1 // pred_region
      %s29 = ssub.s32 2048, 2048
      %30 = vsyncadd [#allocation5], %s29
      %s31 = sshll.u32 [#allocation4], 4
      %s32 = int_to_ptr.vmem [resolvable:$true] %s31
      %37 = dma.hbm_to_vmem [thread:$0]  %s2, 2048, %s32, [#allocation5], 128, 128, 8
    $region13: #{_forward_impl.1} parent=1 // pred_fallthru
      _
    // Predicated region
    $region14: #{_forward_impl.1} parent=1 // pred_check
      _
    $region15: #{_forward_impl.1} parent=1 // pred_check_branch
      %39 = sbr.rel (0) target = $region17
    $region16: #{_forward_impl.1} parent=1 // pred_region
      %s41 = ssub.s32 2048, 2048
      %42 = vsyncadd [#allocation5], %s41
      %s43 = sshll.u32 [#allocation6], 4
      %s44 = int_to_ptr.vmem [resolvable:$true] %s43
      %49 = dma.hbm_to_vmem [thread:$0]  %s3, 2048, %s44, [#allocation5], 128, 128, 8
    $region17: #{_forward_impl.1} parent=1 // pred_fallthru
      _
    // Predicated region
    $region18: #{_forward_impl.1} parent=1 // pred_check
      _
    $region19: #{_forward_impl.1} parent=1 // pred_check_branch
      %51 = sbr.rel (0) target = $region21
    $region20: #{_forward_impl.1} parent=1 // pred_region
      _
    $region21: #{_forward_impl.1} parent=1 // pred_fallthru
      _
    // Predicated region
    $region22: #{_forward_impl.1} parent=1 // pred_check
      _
    $region23: #{_forward_impl.1} parent=1 // pred_check_branch
      %53 = sbr.rel (0) target = $region25
    $region24: #{_forward_impl.1} parent=1 // pred_region
      %54 = dma.done [#allocation3], 2048
    $region25: #{_forward_impl.1} parent=1 // pred_fallthru
      _
    // Predicated region
    $region26: #{_forward_impl.1} parent=1 // pred_check
      _
    $region27: #{_forward_impl.1} parent=1 // pred_check_branch
      %56 = sbr.rel (0) target = $region29
    $region28: #{_forward_impl.1} parent=1 // pred_region
      %57 = dma.done [#allocation5], 2048
    $region29: #{_forward_impl.1} parent=1 // pred_fallthru
      _
    // Predicated region
    $region30: #{_forward_impl.1} parent=1 // pred_check
      _
    $region31: #{_forward_impl.1} parent=1 // pred_check_branch
      %59 = sbr.rel (0) target = $region33
    $region32: #{_forward_impl.1} parent=1 // pred_region
      %60 = dma.done [#allocation5], 2048
    $region33: #{_forward_impl.1} parent=1 // pred_fallthru
      _
    %v61 = vld [vmem:[%s0] sm:$0xff]
    %v62 = vld [vmem:[#allocation2] sm:$0xff]
    %v63 = vld [vmem:[#allocation2 + $0x8] sm:$0xff]
    %v64 = vld [vmem:[#allocation2 + $0x10] sm:$0xff]
    %v65 = vld [vmem:[#allocation2 + $0x18] sm:$0xff]
    %v66 = vld [vmem:[#allocation2 + $0x20] sm:$0xff]
    %v67 = vld [vmem:[#allocation2 + $0x28] sm:$0xff]
    %v68 = vld [vmem:[#allocation2 + $0x30] sm:$0xff]
    %v69 = vld [vmem:[#allocation2 + $0x38] sm:$0xff]
    %v70 = vld [vmem:[#allocation2 + $0x40] sm:$0xff]
    %v71 = vld [vmem:[#allocation2 + $0x48] sm:$0xff]
    %v72 = vld [vmem:[#allocation2 + $0x50] sm:$0xff]
    %v73 = vld [vmem:[#allocation2 + $0x58] sm:$0xff]
    %v74 = vld [vmem:[#allocation2 + $0x60] sm:$0xff]
    %v75 = vld [vmem:[#allocation2 + $0x68] sm:$0xff]
    %v76 = vld [vmem:[#allocation2 + $0x70] sm:$0xff]
    %v77 = vld [vmem:[#allocation2 + $0x78] sm:$0xff]
    %v78 = vld [vmem:[%s4] sm:$0x1]
    %v80 = vlaneseq
    %v81 = vshrl.u32 %v80, 7
    %v82 = vsub.s32 0, %v81
    %v83 = vrot.slane %v78, %v82
    %85 = vmatprep.subr.mxu0 0.0
    %86 = vmatpush1.msra.mxu0 %v77
    %87 = vmatprep.subr.mxu0 0.0
    %88 = vmatpush1.msra.mxu0 %v76
    %89 = vmatprep.subr.mxu0 0.0
    %90 = vmatpush1.msra.mxu0 %v75
    %91 = vmatprep.subr.mxu0 0.0
    %92 = vmatpush1.msra.mxu0 %v74
    %93 = vmatprep.subr.mxu0 0.0
    %94 = vmatpush1.msra.mxu0 %v73
    %95 = vmatprep.subr.mxu0 0.0
    %96 = vmatpush1.msra.mxu0 %v72
    %97 = vmatprep.subr.mxu0 0.0
    %98 = vmatpush1.msra.mxu0 %v71
    %99 = vmatprep.subr.mxu0 0.0
    %100 = vmatpush1.msra.mxu0 %v70
    %101 = vmatprep.subr.mxu0 0.0
    %102 = vmatpush1.msra.mxu0 %v69
    %103 = vmatprep.subr.mxu0 0.0
    %104 = vmatpush1.msra.mxu0 %v68
    %105 = vmatprep.subr.mxu0 0.0
    %106 = vmatpush1.msra.mxu0 %v67
    %107 = vmatprep.subr.mxu0 0.0
    %108 = vmatpush1.msra.mxu0 %v66
    %109 = vmatprep.subr.mxu0 0.0
    %110 = vmatpush1.msra.mxu0 %v65
    %111 = vmatprep.subr.mxu0 0.0
    %112 = vmatpush1.msra.mxu0 %v64
    %113 = vmatprep.subr.mxu0 0.0
    %114 = vmatpush1.msra.mxu0 %v63
    %115 = vmatprep.subr.mxu0 0.0
    %116 = vmatpush1.msra.mxu0 %v62
    %117 = vmatprep.subr.mxu0 0.0
    %118 = vmatpush2.msra.mxu0 0.0
    %119 = vmatprep.subr.mxu0 0.0
    %120 = vmatpush2.msra.mxu0 0.0
    %121 = vmatprep.subr.mxu0 0.0
    %122 = vmatpush2.msra.mxu0 0.0
    %123 = vmatprep.subr.mxu0 0.0
    %124 = vmatpush2.msra.mxu0 0.0
    %125 = vmatprep.subr.mxu0 0.0
    %126 = vmatpush2.msra.mxu0 0.0
    %127 = vmatprep.subr.mxu0 0.0
    %128 = vmatpush2.msra.mxu0 0.0
    %129 = vmatprep.subr.mxu0 0.0
    %130 = vmatpush2.msra.mxu0 0.0
    %131 = vmatprep.subr.mxu0 0.0
    %132 = vmatpush2.msra.mxu0 0.0
    %133 = vmatprep.subr.mxu0 0.0
    %134 = vmatpush2.msra.mxu0 0.0
    %135 = vmatprep.subr.mxu0 0.0
    %136 = vmatpush2.msra.mxu0 0.0
    %137 = vmatprep.subr.mxu0 0.0
    %138 = vmatpush2.msra.mxu0 0.0
    %139 = vmatprep.subr.mxu0 0.0
    %140 = vmatpush2.msra.mxu0 0.0
    %141 = vmatprep.subr.mxu0 0.0
    %142 = vmatpush2.msra.mxu0 0.0
    %143 = vmatprep.subr.mxu0 0.0
    %144 = vmatpush2.msra.mxu0 0.0
    %145 = vmatprep.subr.mxu0 0.0
    %146 = vmatpush2.msra.mxu0 0.0
    %147 = vmatprep.subr.mxu0 0.0
    %148 = vmatpush2.msra.mxu0 0.0
    %149 = vmatprep.mubr.f32.mxu0 0.0
    %150 = vmatmul.mubr.f32.gmra.mxu0 %v61
    %v151 = vpop.f32.mrf.mxu0
    %v152 = vadd.f32 %v83, %v151
    %v153 = vpop.f32.mrf.mxu0
    %154 = vdwg.mxu0
    %v155 = vmax.f32 %v152, 0.0
    %vm156 = vcmask 261120
    %v157 = vsel %vm156, %v155, 0.0
    %159 = vrot.lane.b32.xlu0 %v155, 96
    %v160 = vpop.permute.xlu0 %159
    %v162 = vsel %vm156, %v160, 0.0
    %163 = vrot.lane.b32.xlu0 %v155, 64
    %v164 = vpop.permute.xlu0 %163
    %vm166 = vcmask 64512
    %v167 = vsel %vm166, %v164, 0.0
    %v168 = vld [vmem:[#allocation4] sm:$0xff]
    %v169 = vld [vmem:[#allocation4 + $0x8] sm:$0xff]
    %v170 = vld [vmem:[#allocation4 + $0x10] sm:$0xff]
    %v171 = vld [vmem:[#allocation4 + $0x18] sm:$0xff]
    %v172 = vld [vmem:[#allocation4 + $0x20] sm:$0xff]
    %v173 = vld [vmem:[#allocation4 + $0x28] sm:$0xff]
    %v174 = vld [vmem:[#allocation4 + $0x30] sm:$0xff]
    %v175 = vld [vmem:[#allocation4 + $0x38] sm:$0xff]
    %v176 = vld [vmem:[#allocation4 + $0x40] sm:$0xff]
    %v177 = vld [vmem:[#allocation4 + $0x48] sm:$0xff]
    %v178 = vld [vmem:[#allocation4 + $0x50] sm:$0xff]
    %v179 = vld [vmem:[#allocation4 + $0x58] sm:$0xff]
    %v180 = vld [vmem:[#allocation4 + $0x60] sm:$0xff]
    %v181 = vld [vmem:[#allocation4 + $0x68] sm:$0xff]
    %v182 = vld [vmem:[#allocation4 + $0x70] sm:$0xff]
    %v183 = vld [vmem:[#allocation4 + $0x78] sm:$0xff]
    %v184 = vld [vmem:[%s4 + $0x1] sm:$0x1]
    %v186 = vlaneseq
    %v187 = vshrl.u32 %v186, 7
    %v188 = vsub.s32 0, %v187
    %v189 = vrot.slane %v184, %v188
    %191 = vmatprep.subr.mxu0 0.0
    %192 = vmatpush1.msra.mxu0 %v183
    %193 = vmatprep.subr.mxu0 0.0
    %194 = vmatpush1.msra.mxu0 %v182
    %195 = vmatprep.subr.mxu0 0.0
    %196 = vmatpush1.msra.mxu0 %v181
    %197 = vmatprep.subr.mxu0 0.0
    %198 = vmatpush1.msra.mxu0 %v180
    %199 = vmatprep.subr.mxu0 0.0
    %200 = vmatpush1.msra.mxu0 %v179
    %201 = vmatprep.subr.mxu0 0.0
    %202 = vmatpush1.msra.mxu0 %v178
    %203 = vmatprep.subr.mxu0 0.0
    %204 = vmatpush1.msra.mxu0 %v177
    %205 = vmatprep.subr.mxu0 0.0
    %206 = vmatpush1.msra.mxu0 %v176
    %207 = vmatprep.subr.mxu0 0.0
    %208 = vmatpush1.msra.mxu0 %v175
    %209 = vmatprep.subr.mxu0 0.0
    %210 = vmatpush1.msra.mxu0 %v174
    %211 = vmatprep.subr.mxu0 0.0
    %212 = vmatpush1.msra.mxu0 %v173
    %213 = vmatprep.subr.mxu0 0.0
    %214 = vmatpush1.msra.mxu0 %v172
    %215 = vmatprep.subr.mxu0 0.0
    %216 = vmatpush1.msra.mxu0 %v171
    %217 = vmatprep.subr.mxu0 0.0
    %218 = vmatpush1.msra.mxu0 %v170
    %219 = vmatprep.subr.mxu0 0.0
    %220 = vmatpush1.msra.mxu0 %v169
    %221 = vmatprep.subr.mxu0 0.0
    %222 = vmatpush1.msra.mxu0 %v168
    %223 = vmatprep.subr.mxu0 0.0
    %224 = vmatpush2.msra.mxu0 0.0
    %225 = vmatprep.subr.mxu0 0.0
    %226 = vmatpush2.msra.mxu0 0.0
    %227 = vmatprep.subr.mxu0 0.0
    %228 = vmatpush2.msra.mxu0 0.0
    %229 = vmatprep.subr.mxu0 0.0
    %230 = vmatpush2.msra.mxu0 0.0
    %231 = vmatprep.subr.mxu0 0.0
    %232 = vmatpush2.msra.mxu0 0.0
    %233 = vmatprep.subr.mxu0 0.0
    %234 = vmatpush2.msra.mxu0 0.0
    %235 = vmatprep.subr.mxu0 0.0
    %236 = vmatpush2.msra.mxu0 0.0
    %237 = vmatprep.subr.mxu0 0.0
    %238 = vmatpush2.msra.mxu0 0.0
    %239 = vmatprep.subr.mxu0 0.0
    %240 = vmatpush2.msra.mxu0 0.0
    %241 = vmatprep.subr.mxu0 0.0
    %242 = vmatpush2.msra.mxu0 0.0
    %243 = vmatprep.subr.mxu0 0.0
    %244 = vmatpush2.msra.mxu0 0.0
    %245 = vmatprep.subr.mxu0 0.0
    %246 = vmatpush2.msra.mxu0 0.0
    %247 = vmatprep.subr.mxu0 0.0
    %248 = vmatpush2.msra.mxu0 0.0
    %249 = vmatprep.subr.mxu0 0.0
    %250 = vmatpush2.msra.mxu0 0.0
    %251 = vmatprep.subr.mxu0 0.0
    %252 = vmatpush2.msra.mxu0 0.0
    %253 = vmatprep.subr.mxu0 0.0
    %254 = vmatpush2.msra.mxu0 0.0
    %255 = vmatprep.mubr.f32.mxu0 0.0
    %256 = vmatmul.mubr.f32.gmra.mxu0 %v157
    %v257 = vpop.f32.mrf.mxu0
    %v258 = vadd.f32 %v189, %v257
    %v259 = vpop.f32.mrf.mxu0
    %260 = vdwg.mxu0
    %v261 = vmax.f32 %v258, 0.0
    %v262 = vsel %vm156, %v261, 0.0
    %264 = vrot.lane.b32.xlu0 %v261, 96
    %v265 = vpop.permute.xlu0 %264
    %v267 = vsel %vm166, %v265, 0.0
    %v268 = vadd.f32 %v162, %v262
    %v269 = vld [vmem:[#allocation6] sm:$0xff]
    %v270 = vld [vmem:[#allocation6 + $0x8] sm:$0xff]
    %v271 = vld [vmem:[#allocation6 + $0x10] sm:$0xff]
    %v272 = vld [vmem:[#allocation6 + $0x18] sm:$0xff]
    %v273 = vld [vmem:[#allocation6 + $0x20] sm:$0xff]
    %v274 = vld [vmem:[#allocation6 + $0x28] sm:$0xff]
    %v275 = vld [vmem:[#allocation6 + $0x30] sm:$0xff]
    %v276 = vld [vmem:[#allocation6 + $0x38] sm:$0xff]
    %v277 = vld [vmem:[#allocation6 + $0x40] sm:$0xff]
    %v278 = vld [vmem:[#allocation6 + $0x48] sm:$0xff]
    %v279 = vld [vmem:[#allocation6 + $0x50] sm:$0xff]
    %v280 = vld [vmem:[#allocation6 + $0x58] sm:$0xff]
    %v281 = vld [vmem:[#allocation6 + $0x60] sm:$0xff]
    %v282 = vld [vmem:[#allocation6 + $0x68] sm:$0xff]
    %v283 = vld [vmem:[#allocation6 + $0x70] sm:$0xff]
    %v284 = vld [vmem:[#allocation6 + $0x78] sm:$0xff]
    %v285 = vld [vmem:[%s4 + $0x2] sm:$0x1]
    %v287 = vlaneseq
    %v288 = vshrl.u32 %v287, 7
    %v289 = vsub.s32 0, %v288
    %v290 = vrot.slane %v285, %v289
    %292 = vmatprep.subr.mxu0 0.0
    %293 = vmatpush1.msra.mxu0 %v284
    %294 = vmatprep.subr.mxu0 0.0
    %295 = vmatpush1.msra.mxu0 %v283
    %296 = vmatprep.subr.mxu0 0.0
    %297 = vmatpush1.msra.mxu0 %v282
    %298 = vmatprep.subr.mxu0 0.0
    %299 = vmatpush1.msra.mxu0 %v281
    %300 = vmatprep.subr.mxu0 0.0
    %301 = vmatpush1.msra.mxu0 %v280
    %302 = vmatprep.subr.mxu0 0.0
    %303 = vmatpush1.msra.mxu0 %v279
    %304 = vmatprep.subr.mxu0 0.0
    %305 = vmatpush1.msra.mxu0 %v278
    %306 = vmatprep.subr.mxu0 0.0
    %307 = vmatpush1.msra.mxu0 %v277
    %308 = vmatprep.subr.mxu0 0.0
    %309 = vmatpush1.msra.mxu0 %v276
    %310 = vmatprep.subr.mxu0 0.0
    %311 = vmatpush1.msra.mxu0 %v275
    %312 = vmatprep.subr.mxu0 0.0
    %313 = vmatpush1.msra.mxu0 %v274
    %314 = vmatprep.subr.mxu0 0.0
    %315 = vmatpush1.msra.mxu0 %v273
    %316 = vmatprep.subr.mxu0 0.0
    %317 = vmatpush1.msra.mxu0 %v272
    %318 = vmatprep.subr.mxu0 0.0
    %319 = vmatpush1.msra.mxu0 %v271
    %320 = vmatprep.subr.mxu0 0.0
    %321 = vmatpush1.msra.mxu0 %v270
    %322 = vmatprep.subr.mxu0 0.0
    %323 = vmatpush1.msra.mxu0 %v269
    %324 = vmatprep.subr.mxu0 0.0
    %325 = vmatpush2.msra.mxu0 0.0
    %326 = vmatprep.subr.mxu0 0.0
    %327 = vmatpush2.msra.mxu0 0.0
    %328 = vmatprep.subr.mxu0 0.0
    %329 = vmatpush2.msra.mxu0 0.0
    %330 = vmatprep.subr.mxu0 0.0
    %331 = vmatpush2.msra.mxu0 0.0
    %332 = vmatprep.subr.mxu0 0.0
    %333 = vmatpush2.msra.mxu0 0.0
    %334 = vmatprep.subr.mxu0 0.0
    %335 = vmatpush2.msra.mxu0 0.0
    %336 = vmatprep.subr.mxu0 0.0
    %337 = vmatpush2.msra.mxu0 0.0
    %338 = vmatprep.subr.mxu0 0.0
    %339 = vmatpush2.msra.mxu0 0.0
    %340 = vmatprep.subr.mxu0 0.0
    %341 = vmatpush2.msra.mxu0 0.0
    %342 = vmatprep.subr.mxu0 0.0
    %343 = vmatpush2.msra.mxu0 0.0
    %344 = vmatprep.subr.mxu0 0.0
    %345 = vmatpush2.msra.mxu0 0.0
    %346 = vmatprep.subr.mxu0 0.0
    %347 = vmatpush2.msra.mxu0 0.0
    %348 = vmatprep.subr.mxu0 0.0
    %349 = vmatpush2.msra.mxu0 0.0
    %350 = vmatprep.subr.mxu0 0.0
    %351 = vmatpush2.msra.mxu0 0.0
    %352 = vmatprep.subr.mxu0 0.0
    %353 = vmatpush2.msra.mxu0 0.0
    %354 = vmatprep.subr.mxu0 0.0
    %355 = vmatpush2.msra.mxu0 0.0
    %356 = vmatprep.mubr.f32.mxu0 0.0
    %357 = vmatmul.mubr.f32.gmra.mxu0 %v268
    %v358 = vpop.f32.mrf.mxu0
    %v359 = vadd.f32 %v290, %v358
    %v360 = vpop.f32.mrf.mxu0
    %361 = vdwg.mxu0
    %v362 = vmax.f32 %v359, 0.0
    %v363 = vadd.f32 %v167, %v267
    %v364 = vadd.f32 %v363, %v362
    %365 = vst [vmem:[%s5] sm:$0xff] %v364
    // Predicated region
    $region34: #{_forward_impl.1} parent=1 // pred_check
      _
    $region35: #{_forward_impl.1} parent=1 // pred_check_branch
      %367 = sbr.rel (0) target = $region37
    $region36: #{_forward_impl.1} parent=1 // pred_region
      _
    $region37: #{_forward_impl.1} parent=1 // pred_fallthru
      _
    // Predicated region
    $region38: #{_forward_impl.1} parent=1 // pred_check
      _
    $region39: #{_forward_impl.1} parent=1 // pred_check_branch
      %369 = sbr.rel (0) target = $region41
    $region40: #{_forward_impl.1} parent=1 // pred_region
      _
    $region41: #{_forward_impl.1} parent=1 // pred_fallthru
      _
    %370 = vsyncpa [#allocation3], 1
    %371 = vsyncpa [#allocation5], 1

</llo_original>
